<compile_context>
chip_gen: v6e
topology: v6e:2x2x1
jax: 0.10.0
libtpu: 0.0.40
codegen_flags: <defaults>
</compile_context>

<pallas_src>
import jax
import jax.numpy as jnp
from jax.experimental import pallas as pl
from jax.experimental.pallas import tpu as pltpu


def _round_up(x, m):
    return (x + m - 1) // m * m


# --------------------------------------------------------------------------
# Kernel
# --------------------------------------------------------------------------
def _multivae_kernel(hist_ids_ref, pn_ids_ref, q_emb_ref, p_emb_ref,
                     qw1_ref, qb1_ref, qw2_ref, qb2_ref,
                     pw1_ref, pb1_ref, pw2_ref, pb2_ref,
                     logits_ref, mulv_ref):
    f32 = jnp.float32
    edim = qw1_ref.shape[0]
    item_pad = q_emb_ref.shape[0]

    ids = hist_ids_ref[...]                                   # (tB, L) int32
    tB, L = ids.shape

    # ---- mask = F.normalize((hist != 0).float(), dim=-1); dropout == id ----
    mask = (ids != 0).astype(f32)                             # 0/1
    count = jnp.sum(mask, axis=-1, keepdims=True)             # == ||mask||^2
    mask = mask * jax.lax.rsqrt(jnp.maximum(count, 1e-24))    # == x/max(||x||,1e-12)

    # ---- weighted multi-hot  M[b, i] = sum_l mask[b, l] * (ids[b, l] == i) --
    item_iota = jax.lax.broadcasted_iota(jnp.int32, (1, item_pad), 1)
    m_hot = jnp.zeros((tB, item_pad), f32)
    for l in range(L):                                        # small static unroll
        m_hot = m_hot + mask[:, l:l + 1] * (
            ids[:, l:l + 1] == item_iota).astype(f32)

    # ---- hu = sum_L mask * q_emb[hist]  ==  M @ q_emb  (in-kernel gather) ---
    hu = jnp.dot(m_hot, q_emb_ref[...], preferred_element_type=f32)   # (tB, E)

    # ---- encoder: tanh(q_lin1) -> fused q_lin2 -> [mu || logvar] ------------
    h1 = jnp.tanh(jnp.dot(hu, qw1_ref[...], preferred_element_type=f32)
                  + qb1_ref[...])
    mlv = jnp.dot(h1, qw2_ref[...], preferred_element_type=f32) + qb2_ref[...]
    mulv_ref[...] = mlv                                       # packed (tB, 2E)
    mu = mlv[:, :edim]

    # ---- reparameterize (eval) == mu ; decoder MLP --------------------------
    h2 = jnp.tanh(jnp.dot(mu, pw1_ref[...], preferred_element_type=f32)
                  + pb1_ref[...])
    hu2 = jnp.dot(h2, pw2_ref[...], preferred_element_type=f32) + pb2_ref[...]

    # ---- pos/neg logits via one-hot row-gather of p_emb ---------------------
    pn = pn_ids_ref[...]                                      # (tB, 2) int32
    pos_oh = (pn[:, 0:1] == item_iota).astype(f32)            # (tB, item_pad)
    neg_oh = (pn[:, 1:2] == item_iota).astype(f32)
    pos_emb = jnp.dot(pos_oh, p_emb_ref[...], preferred_element_type=f32)
    neg_emb = jnp.dot(neg_oh, p_emb_ref[...], preferred_element_type=f32)
    logits_ref[:, 0:1] = jnp.sum(hu2 * pos_emb, axis=-1, keepdims=True)
    logits_ref[:, 1:2] = jnp.sum(hu2 * neg_emb, axis=-1, keepdims=True)


# --------------------------------------------------------------------------
# Parameter preparation (only the item axis of the tables is padded; the
# data path / feature dim stays at the logical edim, all f32)
# --------------------------------------------------------------------------
def pack_params(params):
    item_num, edim = params["q_emb"].shape
    item_pad = _round_up(item_num, 8)

    def pad_table(t):
        return jnp.zeros((item_pad, edim), jnp.float32).at[:item_num].set(
            t.astype(jnp.float32))

    kp = {k: v.astype(jnp.float32) for k, v in params.items()}
    kp["q_emb"] = pad_table(params["q_emb"])
    kp["p_emb"] = pad_table(params["p_emb"])
    return kp


# --------------------------------------------------------------------------
# Forward wrapper
# --------------------------------------------------------------------------
def multivae_forward(kp, user_hist, pos_item, neg_item):
    """Eval-mode MultiVAE forward.

    Returns (pos_logits (B,), neg_logits (B,), mu (B, edim), logvar (B, edim)).
    """
    q_emb, p_emb = kp["q_emb"], kp["p_emb"]
    item_pad, edim = q_emb.shape

    if user_hist.ndim == 3:
        # robust to B == 1 (PyTorch user_hist.squeeze() would also drop batch)
        user_hist = jnp.squeeze(user_hist, axis=1)
    user_hist = user_hist.astype(jnp.int32)
    B, L = user_hist.shape

    # ---- batch tiling: multiple of 8 sublanes; >=2 grid steps when B > 8
    #      so the "parallel" axis can split across v7x's 2 TensorCores --------
    if B > 8:
        tile_b = min(128, _round_up(pl.cdiv(B, 2), 8))
    else:
        tile_b = 8
    B_pad = _round_up(B, tile_b)
    grid = (B_pad // tile_b,)

    hist_ids = jnp.zeros((B_pad, L), jnp.int32).at[:B].set(user_hist)
    pn_ids = (jnp.zeros((B_pad, 2), jnp.int32)
              .at[:B, 0].set(pos_item.reshape(-1).astype(jnp.int32))
              .at[:B, 1].set(neg_item.reshape(-1).astype(jnp.int32)))

    weights = (kp["q_w1"], kp["q_b1"], kp["q_w2"], kp["q_b2"],
               kp["p_w1"], kp["p_b1"], kp["p_w2"], kp["p_b2"])

    def resident(a):  # full-array block, constant index -> stays in VMEM
        return pl.BlockSpec(a.shape, lambda i: (0, 0))

    in_specs = ([pl.BlockSpec((tile_b, L), lambda i: (i, 0)),     # hist ids
                 pl.BlockSpec((tile_b, 2), lambda i: (i, 0)),     # pos/neg ids
                 resident(q_emb), resident(p_emb)]
                + [resident(w) for w in weights])
    out_specs = (pl.BlockSpec((tile_b, 2), lambda i: (i, 0)),        # logits
                 pl.BlockSpec((tile_b, 2 * edim), lambda i: (i, 0)))  # mu||logvar
    out_shapes = (jax.ShapeDtypeStruct((B_pad, 2), jnp.float32),
                  jax.ShapeDtypeStruct((B_pad, 2 * edim), jnp.float32))

    # ---- VMEM budget (generation-aware when possible) -----------------------
    resident_bytes = sum(int(a.size) * a.dtype.itemsize
                         for a in (q_emb, p_emb) + weights)
    stream_bytes = tile_b * (L + 2 + 2 + 2 * edim) * 4
    temp_bytes = tile_b * (3 * item_pad + 10 * edim) * 4
    want = 2 * (stream_bytes + resident_bytes) + temp_bytes + (2 << 20)
    try:
        vmem_cap = int(pltpu.get_tpu_info().vmem_capacity_bytes)
    except Exception:
        vmem_cap = 64 * 2 ** 20
    vmem_limit = int(min(max(want, 4 * 2 ** 20), vmem_cap // 2))

    flops = B_pad * (3 * L * item_pad                 # multi-hot build
                     + 2 * item_pad * edim * 3        # 3 table matmuls
                     + 2 * edim * edim * 3            # q1 / p1 / p2
                     + 2 * edim * 2 * edim            # fused q2
                     + 6 * edim)                      # logits dots / adds
    bytes_accessed = (hist_ids.size * 4 + pn_ids.size * 4 + resident_bytes
                      + B_pad * (2 + 2 * edim) * 4)
    cost = pl.CostEstimate(flops=flops, transcendentals=2 * B_pad * edim,
                           bytes_accessed=bytes_accessed)

    logits, mulv = pl.pallas_call(
        _multivae_kernel,
        grid=grid,
        in_specs=in_specs,
        out_specs=out_specs,
        out_shape=out_shapes,
        compiler_params=pltpu.CompilerParams(
            dimension_semantics=("parallel",),
            vmem_limit_bytes=vmem_limit),
        cost_estimate=cost,
    )(hist_ids, pn_ids, q_emb, p_emb, *weights)

    return (logits[:B, 0], logits[:B, 1],
            mulv[:B, :edim], mulv[:B, edim:2 * edim])


# --------------------------------------------------------------------------
# Logical (PyTorch-equivalent) parameters + pure-JAX reference
# --------------------------------------------------------------------------
def init_params(key, item_num, edim):
    ks = jax.random.split(key, 10)
    bound = 0.5 / item_num

    def emb(k):
        w = jax.random.uniform(k, (item_num, edim), jnp.float32,
                               minval=-bound, maxval=bound)
        return w.at[0].set(0.0)                   # padding_idx=0

    def lin(kw, kb, fan_in, fan_out):
        lim = 1.0 / jnp.sqrt(fan_in)
        # weight stored pre-transposed: (in, out) so forward does x @ W + b
        w = jax.random.uniform(kw, (fan_in, fan_out), jnp.float32,
                               minval=-lim, maxval=lim)
        b = jax.random.uniform(kb, (1, fan_out), jnp.float32,
                               minval=-lim, maxval=lim)
        return w, b

    q_w1, q_b1 = lin(ks[2], ks[3], edim, edim)
    q_w2, q_b2 = lin(ks[4], ks[5], edim, 2 * edim)
    p_w1, p_b1 = lin(ks[6], ks[7], edim, edim)
    p_w2, p_b2 = lin(ks[8], ks[9], edim, edim)

    return dict(q_emb=emb(ks[0]), p_emb=emb(ks[1]),
                q_w1=q_w1, q_b1=q_b1, q_w2=q_w2, q_b2=q_b2,
                p_w1=p_w1, p_b1=p_b1, p_w2=p_w2, p_b2=p_b2)


def _reference_forward(params, user_hist, pos_item, neg_item):
    """Pure-JAX f32 reference (same eval-mode math) for a sanity check."""
    user_hist = jnp.squeeze(user_hist, axis=1)
    hist_emb = params["q_emb"][user_hist]
    mask = (user_hist != 0).astype(jnp.float32)
    mask = mask / jnp.maximum(
        jnp.sqrt(jnp.sum(mask * mask, axis=-1, keepdims=True)), 1e-12)
    hu = jnp.sum(hist_emb * mask[:, :, None], axis=1)
    h = jnp.tanh(hu @ params["q_w1"] + params["q_b1"])
    mlv = h @ params["q_w2"] + params["q_b2"]
    edim = params["q_emb"].shape[1]
    mu, logvar = mlv[:, :edim], mlv[:, edim:]
    h2 = jnp.tanh(mu @ params["p_w1"] + params["p_b1"])
    hu2 = h2 @ params["p_w2"] + params["p_b2"]
    pos_emb = params["p_emb"][pos_item]
    neg_emb = params["p_emb"][neg_item]
    return (jnp.sum(hu2 * pos_emb, -1), jnp.sum(hu2 * neg_emb, -1), mu, logvar)


if __name__ == "__main__":
    key = jax.random.PRNGKey(0)
    item_num, user_num, edim = 50, 10, 32
    B, L = 8, 16

    k_p, k_h, k_pos, k_neg = jax.random.split(key, 4)
    params = init_params(k_p, item_num, edim)
    kparams = pack_params(params)

    # user_hist: padded item-id history (0 = padding), shape (B, 1, L) before squeeze
    user_hist = jax.random.randint(k_h, (B, 1, L), 0, item_num, dtype=jnp.int32)
    pos_item = jax.random.randint(k_pos, (B,), 1, item_num, dtype=jnp.int32)
    neg_item = jax.random.randint(k_neg, (B,), 1, item_num, dtype=jnp.int32)

    pos_l, neg_l, mu, logvar = jax.block_until_ready(
        multivae_forward(kparams, user_hist, pos_item, neg_item))

    # sanity check against the pure-JAX f32 reference
    r_pos, r_neg, r_mu, r_lv = _reference_forward(params, user_hist,
                                                  pos_item, neg_item)
    assert jnp.allclose(pos_l, r_pos, atol=5e-3, rtol=5e-2)
    assert jnp.allclose(neg_l, r_neg, atol=5e-3, rtol=5e-2)
    assert jnp.allclose(mu, r_mu, atol=5e-3, rtol=5e-2)
    assert jnp.allclose(logvar, r_lv, atol=5e-3, rtol=5e-2)

    print("KERNEL_OK")
</pallas_src>

<mosaic_0001>
module attributes {stable_mosaic.version = 11 : i64} {
  func.func @_multivae_kernel(%arg0: i32, %arg1: memref<8x16xi32, #tpu.memory_space<vmem>>, %arg2: memref<8x2xi32, #tpu.memory_space<vmem>>, %arg3: memref<56x32xf32, #tpu.memory_space<vmem>>, %arg4: memref<56x32xf32, #tpu.memory_space<vmem>>, %arg5: memref<32x32xf32, #tpu.memory_space<vmem>>, %arg6: memref<1x32xf32, #tpu.memory_space<vmem>>, %arg7: memref<32x64xf32, #tpu.memory_space<vmem>>, %arg8: memref<1x64xf32, #tpu.memory_space<vmem>>, %arg9: memref<32x32xf32, #tpu.memory_space<vmem>>, %arg10: memref<1x32xf32, #tpu.memory_space<vmem>>, %arg11: memref<32x32xf32, #tpu.memory_space<vmem>>, %arg12: memref<1x32xf32, #tpu.memory_space<vmem>>, %arg13: memref<8x2xf32, #tpu.memory_space<vmem>>, %arg14: memref<8x64xf32, #tpu.memory_space<vmem>>) attributes {dimension_semantics = [#tpu.dimension_semantics<parallel>], iteration_bounds = array<i64: 1>, scalar_prefetch = 0 : i64, scratch_operands = 0 : i64, tpu.core_type = #tpu.core_type<tc>, window_params = [{transform_indices = @transform_0, window_bounds = array<i64: 8, 16>}, {transform_indices = @transform_1, window_bounds = array<i64: 8, 2>}, {pipeline_mode = #tpu.pipeline_mode<synchronous>, transform_indices = @transform_2, window_bounds = array<i64: 56, 32>}, {pipeline_mode = #tpu.pipeline_mode<synchronous>, transform_indices = @transform_3, window_bounds = array<i64: 56, 32>}, {pipeline_mode = #tpu.pipeline_mode<synchronous>, transform_indices = @transform_4, window_bounds = array<i64: 32, 32>}, {pipeline_mode = #tpu.pipeline_mode<synchronous>, transform_indices = @transform_5, window_bounds = array<i64: 1, 32>}, {pipeline_mode = #tpu.pipeline_mode<synchronous>, transform_indices = @transform_6, window_bounds = array<i64: 32, 64>}, {pipeline_mode = #tpu.pipeline_mode<synchronous>, transform_indices = @transform_7, window_bounds = array<i64: 1, 64>}, {pipeline_mode = #tpu.pipeline_mode<synchronous>, transform_indices = @transform_8, window_bounds = array<i64: 32, 32>}, {pipeline_mode = #tpu.pipeline_mode<synchronous>, transform_indices = @transform_9, window_bounds = array<i64: 1, 32>}, {pipeline_mode = #tpu.pipeline_mode<synchronous>, transform_indices = @transform_10, window_bounds = array<i64: 32, 32>}, {pipeline_mode = #tpu.pipeline_mode<synchronous>, transform_indices = @transform_11, window_bounds = array<i64: 1, 32>}, {transform_indices = @transform_12, window_bounds = array<i64: 8, 2>}, {transform_indices = @transform_13, window_bounds = array<i64: 8, 64>}]} {
    %c0 = arith.constant 0 : index
    %c0_0 = arith.constant 0 : index
    %0 = vector.load %arg1[%c0, %c0_0] : memref<8x16xi32, #tpu.memory_space<vmem>>, vector<8x16xi32>
    %c0_i32 = arith.constant 0 : i32
    %1 = vector.broadcast %c0_i32 : i32 to vector<8x16xi32>
    %2 = arith.cmpi ne, %0, %1 : vector<8x16xi32>
    %3 = arith.extui %2 : vector<8x16xi1> to vector<8x16xi32>
    %4 = arith.sitofp %3 : vector<8x16xi32> to vector<8x16xf32>
    %cst = arith.constant dense<0.000000e+00> : vector<8xf32>
    %5 = vector.multi_reduction <add>, %4, %cst [1] : vector<8x16xf32> to vector<8xf32>
    %6 = vector.shape_cast %5 : vector<8xf32> to vector<8x1xf32>
    %cst_1 = arith.constant 1.000000e-24 : f32
    %7 = vector.broadcast %cst_1 : f32 to vector<8x1xf32>
    %8 = arith.maximumf %6, %7 : vector<8x1xf32>
    %9 = math.rsqrt %8 : vector<8x1xf32>
    %10 = vector.broadcast %9 : vector<8x1xf32> to vector<8x16xf32>
    %11 = arith.mulf %4, %10 : vector<8x16xf32>
    %12 = tpu.iota {dimensions = array<i32: 1>} : vector<1x56xi32>
    %cst_2 = arith.constant 0.000000e+00 : f32
    %13 = vector.broadcast %cst_2 : f32 to vector<8x56xf32>
    %14 = vector.extract_strided_slice %11 {offsets = [0, 0], sizes = [8, 1], strides = [1, 1]} : vector<8x16xf32> to vector<8x1xf32>
    %15 = vector.extract_strided_slice %0 {offsets = [0, 0], sizes = [8, 1], strides = [1, 1]} : vector<8x16xi32> to vector<8x1xi32>
    %16 = vector.broadcast %15 : vector<8x1xi32> to vector<8x56xi32>
    %17 = vector.broadcast %12 : vector<1x56xi32> to vector<8x56xi32>
    %18 = arith.cmpi eq, %16, %17 : vector<8x56xi32>
    %19 = arith.extui %18 : vector<8x56xi1> to vector<8x56xi32>
    %20 = arith.sitofp %19 : vector<8x56xi32> to vector<8x56xf32>
    %21 = vector.broadcast %14 : vector<8x1xf32> to vector<8x56xf32>
    %22 = arith.mulf %21, %20 : vector<8x56xf32>
    %23 = arith.addf %13, %22 : vector<8x56xf32>
    %24 = vector.extract_strided_slice %11 {offsets = [0, 1], sizes = [8, 1], strides = [1, 1]} : vector<8x16xf32> to vector<8x1xf32>
    %25 = vector.extract_strided_slice %0 {offsets = [0, 1], sizes = [8, 1], strides = [1, 1]} : vector<8x16xi32> to vector<8x1xi32>
    %26 = vector.broadcast %25 : vector<8x1xi32> to vector<8x56xi32>
    %27 = vector.broadcast %12 : vector<1x56xi32> to vector<8x56xi32>
    %28 = arith.cmpi eq, %26, %27 : vector<8x56xi32>
    %29 = arith.extui %28 : vector<8x56xi1> to vector<8x56xi32>
    %30 = arith.sitofp %29 : vector<8x56xi32> to vector<8x56xf32>
    %31 = vector.broadcast %24 : vector<8x1xf32> to vector<8x56xf32>
    %32 = arith.mulf %31, %30 : vector<8x56xf32>
    %33 = arith.addf %23, %32 : vector<8x56xf32>
    %34 = vector.extract_strided_slice %11 {offsets = [0, 2], sizes = [8, 1], strides = [1, 1]} : vector<8x16xf32> to vector<8x1xf32>
    %35 = vector.extract_strided_slice %0 {offsets = [0, 2], sizes = [8, 1], strides = [1, 1]} : vector<8x16xi32> to vector<8x1xi32>
    %36 = vector.broadcast %35 : vector<8x1xi32> to vector<8x56xi32>
    %37 = vector.broadcast %12 : vector<1x56xi32> to vector<8x56xi32>
    %38 = arith.cmpi eq, %36, %37 : vector<8x56xi32>
    %39 = arith.extui %38 : vector<8x56xi1> to vector<8x56xi32>
    %40 = arith.sitofp %39 : vector<8x56xi32> to vector<8x56xf32>
    %41 = vector.broadcast %34 : vector<8x1xf32> to vector<8x56xf32>
    %42 = arith.mulf %41, %40 : vector<8x56xf32>
    %43 = arith.addf %33, %42 : vector<8x56xf32>
    %44 = vector.extract_strided_slice %11 {offsets = [0, 3], sizes = [8, 1], strides = [1, 1]} : vector<8x16xf32> to vector<8x1xf32>
    %45 = vector.extract_strided_slice %0 {offsets = [0, 3], sizes = [8, 1], strides = [1, 1]} : vector<8x16xi32> to vector<8x1xi32>
    %46 = vector.broadcast %45 : vector<8x1xi32> to vector<8x56xi32>
    %47 = vector.broadcast %12 : vector<1x56xi32> to vector<8x56xi32>
    %48 = arith.cmpi eq, %46, %47 : vector<8x56xi32>
    %49 = arith.extui %48 : vector<8x56xi1> to vector<8x56xi32>
    %50 = arith.sitofp %49 : vector<8x56xi32> to vector<8x56xf32>
    %51 = vector.broadcast %44 : vector<8x1xf32> to vector<8x56xf32>
    %52 = arith.mulf %51, %50 : vector<8x56xf32>
    %53 = arith.addf %43, %52 : vector<8x56xf32>
    %54 = vector.extract_strided_slice %11 {offsets = [0, 4], sizes = [8, 1], strides = [1, 1]} : vector<8x16xf32> to vector<8x1xf32>
    %55 = vector.extract_strided_slice %0 {offsets = [0, 4], sizes = [8, 1], strides = [1, 1]} : vector<8x16xi32> to vector<8x1xi32>
    %56 = vector.broadcast %55 : vector<8x1xi32> to vector<8x56xi32>
    %57 = vector.broadcast %12 : vector<1x56xi32> to vector<8x56xi32>
    %58 = arith.cmpi eq, %56, %57 : vector<8x56xi32>
    %59 = arith.extui %58 : vector<8x56xi1> to vector<8x56xi32>
    %60 = arith.sitofp %59 : vector<8x56xi32> to vector<8x56xf32>
    %61 = vector.broadcast %54 : vector<8x1xf32> to vector<8x56xf32>
    %62 = arith.mulf %61, %60 : vector<8x56xf32>
    %63 = arith.addf %53, %62 : vector<8x56xf32>
    %64 = vector.extract_strided_slice %11 {offsets = [0, 5], sizes = [8, 1], strides = [1, 1]} : vector<8x16xf32> to vector<8x1xf32>
    %65 = vector.extract_strided_slice %0 {offsets = [0, 5], sizes = [8, 1], strides = [1, 1]} : vector<8x16xi32> to vector<8x1xi32>
    %66 = vector.broadcast %65 : vector<8x1xi32> to vector<8x56xi32>
    %67 = vector.broadcast %12 : vector<1x56xi32> to vector<8x56xi32>
    %68 = arith.cmpi eq, %66, %67 : vector<8x56xi32>
    %69 = arith.extui %68 : vector<8x56xi1> to vector<8x56xi32>
    %70 = arith.sitofp %69 : vector<8x56xi32> to vector<8x56xf32>
    %71 = vector.broadcast %64 : vector<8x1xf32> to vector<8x56xf32>
    %72 = arith.mulf %71, %70 : vector<8x56xf32>
    %73 = arith.addf %63, %72 : vector<8x56xf32>
    %74 = vector.extract_strided_slice %11 {offsets = [0, 6], sizes = [8, 1], strides = [1, 1]} : vector<8x16xf32> to vector<8x1xf32>
    %75 = vector.extract_strided_slice %0 {offsets = [0, 6], sizes = [8, 1], strides = [1, 1]} : vector<8x16xi32> to vector<8x1xi32>
    %76 = vector.broadcast %75 : vector<8x1xi32> to vector<8x56xi32>
    %77 = vector.broadcast %12 : vector<1x56xi32> to vector<8x56xi32>
    %78 = arith.cmpi eq, %76, %77 : vector<8x56xi32>
    %79 = arith.extui %78 : vector<8x56xi1> to vector<8x56xi32>
    %80 = arith.sitofp %79 : vector<8x56xi32> to vector<8x56xf32>
    %81 = vector.broadcast %74 : vector<8x1xf32> to vector<8x56xf32>
    %82 = arith.mulf %81, %80 : vector<8x56xf32>
    %83 = arith.addf %73, %82 : vector<8x56xf32>
    %84 = vector.extract_strided_slice %11 {offsets = [0, 7], sizes = [8, 1], strides = [1, 1]} : vector<8x16xf32> to vector<8x1xf32>
    %85 = vector.extract_strided_slice %0 {offsets = [0, 7], sizes = [8, 1], strides = [1, 1]} : vector<8x16xi32> to vector<8x1xi32>
    %86 = vector.broadcast %85 : vector<8x1xi32> to vector<8x56xi32>
    %87 = vector.broadcast %12 : vector<1x56xi32> to vector<8x56xi32>
    %88 = arith.cmpi eq, %86, %87 : vector<8x56xi32>
    %89 = arith.extui %88 : vector<8x56xi1> to vector<8x56xi32>
    %90 = arith.sitofp %89 : vector<8x56xi32> to vector<8x56xf32>
    %91 = vector.broadcast %84 : vector<8x1xf32> to vector<8x56xf32>
    %92 = arith.mulf %91, %90 : vector<8x56xf32>
    %93 = arith.addf %83, %92 : vector<8x56xf32>
    %94 = vector.extract_strided_slice %11 {offsets = [0, 8], sizes = [8, 1], strides = [1, 1]} : vector<8x16xf32> to vector<8x1xf32>
    %95 = vector.extract_strided_slice %0 {offsets = [0, 8], sizes = [8, 1], strides = [1, 1]} : vector<8x16xi32> to vector<8x1xi32>
    %96 = vector.broadcast %95 : vector<8x1xi32> to vector<8x56xi32>
    %97 = vector.broadcast %12 : vector<1x56xi32> to vector<8x56xi32>
    %98 = arith.cmpi eq, %96, %97 : vector<8x56xi32>
    %99 = arith.extui %98 : vector<8x56xi1> to vector<8x56xi32>
    %100 = arith.sitofp %99 : vector<8x56xi32> to vector<8x56xf32>
    %101 = vector.broadcast %94 : vector<8x1xf32> to vector<8x56xf32>
    %102 = arith.mulf %101, %100 : vector<8x56xf32>
    %103 = arith.addf %93, %102 : vector<8x56xf32>
    %104 = vector.extract_strided_slice %11 {offsets = [0, 9], sizes = [8, 1], strides = [1, 1]} : vector<8x16xf32> to vector<8x1xf32>
    %105 = vector.extract_strided_slice %0 {offsets = [0, 9], sizes = [8, 1], strides = [1, 1]} : vector<8x16xi32> to vector<8x1xi32>
    %106 = vector.broadcast %105 : vector<8x1xi32> to vector<8x56xi32>
    %107 = vector.broadcast %12 : vector<1x56xi32> to vector<8x56xi32>
    %108 = arith.cmpi eq, %106, %107 : vector<8x56xi32>
    %109 = arith.extui %108 : vector<8x56xi1> to vector<8x56xi32>
    %110 = arith.sitofp %109 : vector<8x56xi32> to vector<8x56xf32>
    %111 = vector.broadcast %104 : vector<8x1xf32> to vector<8x56xf32>
    %112 = arith.mulf %111, %110 : vector<8x56xf32>
    %113 = arith.addf %103, %112 : vector<8x56xf32>
    %114 = vector.extract_strided_slice %11 {offsets = [0, 10], sizes = [8, 1], strides = [1, 1]} : vector<8x16xf32> to vector<8x1xf32>
    %115 = vector.extract_strided_slice %0 {offsets = [0, 10], sizes = [8, 1], strides = [1, 1]} : vector<8x16xi32> to vector<8x1xi32>
    %116 = vector.broadcast %115 : vector<8x1xi32> to vector<8x56xi32>
    %117 = vector.broadcast %12 : vector<1x56xi32> to vector<8x56xi32>
    %118 = arith.cmpi eq, %116, %117 : vector<8x56xi32>
    %119 = arith.extui %118 : vector<8x56xi1> to vector<8x56xi32>
    %120 = arith.sitofp %119 : vector<8x56xi32> to vector<8x56xf32>
    %121 = vector.broadcast %114 : vector<8x1xf32> to vector<8x56xf32>
    %122 = arith.mulf %121, %120 : vector<8x56xf32>
    %123 = arith.addf %113, %122 : vector<8x56xf32>
    %124 = vector.extract_strided_slice %11 {offsets = [0, 11], sizes = [8, 1], strides = [1, 1]} : vector<8x16xf32> to vector<8x1xf32>
    %125 = vector.extract_strided_slice %0 {offsets = [0, 11], sizes = [8, 1], strides = [1, 1]} : vector<8x16xi32> to vector<8x1xi32>
    %126 = vector.broadcast %125 : vector<8x1xi32> to vector<8x56xi32>
    %127 = vector.broadcast %12 : vector<1x56xi32> to vector<8x56xi32>
    %128 = arith.cmpi eq, %126, %127 : vector<8x56xi32>
    %129 = arith.extui %128 : vector<8x56xi1> to vector<8x56xi32>
    %130 = arith.sitofp %129 : vector<8x56xi32> to vector<8x56xf32>
    %131 = vector.broadcast %124 : vector<8x1xf32> to vector<8x56xf32>
    %132 = arith.mulf %131, %130 : vector<8x56xf32>
    %133 = arith.addf %123, %132 : vector<8x56xf32>
    %134 = vector.extract_strided_slice %11 {offsets = [0, 12], sizes = [8, 1], strides = [1, 1]} : vector<8x16xf32> to vector<8x1xf32>
    %135 = vector.extract_strided_slice %0 {offsets = [0, 12], sizes = [8, 1], strides = [1, 1]} : vector<8x16xi32> to vector<8x1xi32>
    %136 = vector.broadcast %135 : vector<8x1xi32> to vector<8x56xi32>
    %137 = vector.broadcast %12 : vector<1x56xi32> to vector<8x56xi32>
    %138 = arith.cmpi eq, %136, %137 : vector<8x56xi32>
    %139 = arith.extui %138 : vector<8x56xi1> to vector<8x56xi32>
    %140 = arith.sitofp %139 : vector<8x56xi32> to vector<8x56xf32>
    %141 = vector.broadcast %134 : vector<8x1xf32> to vector<8x56xf32>
    %142 = arith.mulf %141, %140 : vector<8x56xf32>
    %143 = arith.addf %133, %142 : vector<8x56xf32>
    %144 = vector.extract_strided_slice %11 {offsets = [0, 13], sizes = [8, 1], strides = [1, 1]} : vector<8x16xf32> to vector<8x1xf32>
    %145 = vector.extract_strided_slice %0 {offsets = [0, 13], sizes = [8, 1], strides = [1, 1]} : vector<8x16xi32> to vector<8x1xi32>
    %146 = vector.broadcast %145 : vector<8x1xi32> to vector<8x56xi32>
    %147 = vector.broadcast %12 : vector<1x56xi32> to vector<8x56xi32>
    %148 = arith.cmpi eq, %146, %147 : vector<8x56xi32>
    %149 = arith.extui %148 : vector<8x56xi1> to vector<8x56xi32>
    %150 = arith.sitofp %149 : vector<8x56xi32> to vector<8x56xf32>
    %151 = vector.broadcast %144 : vector<8x1xf32> to vector<8x56xf32>
    %152 = arith.mulf %151, %150 : vector<8x56xf32>
    %153 = arith.addf %143, %152 : vector<8x56xf32>
    %154 = vector.extract_strided_slice %11 {offsets = [0, 14], sizes = [8, 1], strides = [1, 1]} : vector<8x16xf32> to vector<8x1xf32>
    %155 = vector.extract_strided_slice %0 {offsets = [0, 14], sizes = [8, 1], strides = [1, 1]} : vector<8x16xi32> to vector<8x1xi32>
    %156 = vector.broadcast %155 : vector<8x1xi32> to vector<8x56xi32>
    %157 = vector.broadcast %12 : vector<1x56xi32> to vector<8x56xi32>
    %158 = arith.cmpi eq, %156, %157 : vector<8x56xi32>
    %159 = arith.extui %158 : vector<8x56xi1> to vector<8x56xi32>
    %160 = arith.sitofp %159 : vector<8x56xi32> to vector<8x56xf32>
    %161 = vector.broadcast %154 : vector<8x1xf32> to vector<8x56xf32>
    %162 = arith.mulf %161, %160 : vector<8x56xf32>
    %163 = arith.addf %153, %162 : vector<8x56xf32>
    %164 = vector.extract_strided_slice %11 {offsets = [0, 15], sizes = [8, 1], strides = [1, 1]} : vector<8x16xf32> to vector<8x1xf32>
    %165 = vector.extract_strided_slice %0 {offsets = [0, 15], sizes = [8, 1], strides = [1, 1]} : vector<8x16xi32> to vector<8x1xi32>
    %166 = vector.broadcast %165 : vector<8x1xi32> to vector<8x56xi32>
    %167 = vector.broadcast %12 : vector<1x56xi32> to vector<8x56xi32>
    %168 = arith.cmpi eq, %166, %167 : vector<8x56xi32>
    %169 = arith.extui %168 : vector<8x56xi1> to vector<8x56xi32>
    %170 = arith.sitofp %169 : vector<8x56xi32> to vector<8x56xf32>
    %171 = vector.broadcast %164 : vector<8x1xf32> to vector<8x56xf32>
    %172 = arith.mulf %171, %170 : vector<8x56xf32>
    %173 = arith.addf %163, %172 : vector<8x56xf32>
    %c0_3 = arith.constant 0 : index
    %c0_4 = arith.constant 0 : index
    %174 = vector.load %arg3[%c0_3, %c0_4] : memref<56x32xf32, #tpu.memory_space<vmem>>, vector<56x32xf32>
    %cst_5 = arith.constant dense<0.000000e+00> : vector<8x32xf32>
    %175 = tpu.matmul %173, %174, %cst_5 {dimension_numbers = #tpu.dot_dimension_numbers<[1], [0], [0], [1], [0, 0, 1, 1], [], []>} : vector<8x56xf32>, vector<56x32xf32>, vector<8x32xf32> -> vector<8x32xf32>
    %c0_6 = arith.constant 0 : index
    %c0_7 = arith.constant 0 : index
    %176 = vector.load %arg5[%c0_6, %c0_7] : memref<32x32xf32, #tpu.memory_space<vmem>>, vector<32x32xf32>
    %cst_8 = arith.constant dense<0.000000e+00> : vector<8x32xf32>
    %177 = tpu.matmul %175, %176, %cst_8 {dimension_numbers = #tpu.dot_dimension_numbers<[1], [0], [0], [1], [0, 0, 1, 1], [], []>} : vector<8x32xf32>, vector<32x32xf32>, vector<8x32xf32> -> vector<8x32xf32>
    %c0_9 = arith.constant 0 : index
    %c0_10 = arith.constant 0 : index
    %178 = vector.load %arg6[%c0_9, %c0_10] : memref<1x32xf32, #tpu.memory_space<vmem>>, vector<1x32xf32>
    %179 = vector.broadcast %178 : vector<1x32xf32> to vector<8x32xf32>
    %180 = arith.addf %177, %179 : vector<8x32xf32>
    %181 = math.tanh %180 : vector<8x32xf32>
    %c0_11 = arith.constant 0 : index
    %c0_12 = arith.constant 0 : index
    %182 = vector.load %arg7[%c0_11, %c0_12] : memref<32x64xf32, #tpu.memory_space<vmem>>, vector<32x64xf32>
    %cst_13 = arith.constant dense<0.000000e+00> : vector<8x64xf32>
    %183 = tpu.matmul %181, %182, %cst_13 {dimension_numbers = #tpu.dot_dimension_numbers<[1], [0], [0], [1], [0, 0, 1, 1], [], []>} : vector<8x32xf32>, vector<32x64xf32>, vector<8x64xf32> -> vector<8x64xf32>
    %c0_14 = arith.constant 0 : index
    %c0_15 = arith.constant 0 : index
    %184 = vector.load %arg8[%c0_14, %c0_15] : memref<1x64xf32, #tpu.memory_space<vmem>>, vector<1x64xf32>
    %185 = vector.broadcast %184 : vector<1x64xf32> to vector<8x64xf32>
    %186 = arith.addf %183, %185 : vector<8x64xf32>
    %c0_16 = arith.constant 0 : index
    %c0_17 = arith.constant 0 : index
    %187 = vector.load %arg14[%c0_16, %c0_17] : memref<8x64xf32, #tpu.memory_space<vmem>>, vector<8x64xf32>
    tpu.vector_store %arg14[%c0_16, %c0_17], %186 {strides = array<i32>} : memref<8x64xf32, #tpu.memory_space<vmem>>, vector<8x64xf32>,
    %188 = vector.extract_strided_slice %186 {offsets = [0, 0], sizes = [8, 32], strides = [1, 1]} : vector<8x64xf32> to vector<8x32xf32>
    %c0_18 = arith.constant 0 : index
    %c0_19 = arith.constant 0 : index
    %189 = vector.load %arg9[%c0_18, %c0_19] : memref<32x32xf32, #tpu.memory_space<vmem>>, vector<32x32xf32>
    %cst_20 = arith.constant dense<0.000000e+00> : vector<8x32xf32>
    %190 = tpu.matmul %188, %189, %cst_20 {dimension_numbers = #tpu.dot_dimension_numbers<[1], [0], [0], [1], [0, 0, 1, 1], [], []>} : vector<8x32xf32>, vector<32x32xf32>, vector<8x32xf32> -> vector<8x32xf32>
    %c0_21 = arith.constant 0 : index
    %c0_22 = arith.constant 0 : index
    %191 = vector.load %arg10[%c0_21, %c0_22] : memref<1x32xf32, #tpu.memory_space<vmem>>, vector<1x32xf32>
    %192 = vector.broadcast %191 : vector<1x32xf32> to vector<8x32xf32>
    %193 = arith.addf %190, %192 : vector<8x32xf32>
    %194 = math.tanh %193 : vector<8x32xf32>
    %c0_23 = arith.constant 0 : index
    %c0_24 = arith.constant 0 : index
    %195 = vector.load %arg11[%c0_23, %c0_24] : memref<32x32xf32, #tpu.memory_space<vmem>>, vector<32x32xf32>
    %cst_25 = arith.constant dense<0.000000e+00> : vector<8x32xf32>
    %196 = tpu.matmul %194, %195, %cst_25 {dimension_numbers = #tpu.dot_dimension_numbers<[1], [0], [0], [1], [0, 0, 1, 1], [], []>} : vector<8x32xf32>, vector<32x32xf32>, vector<8x32xf32> -> vector<8x32xf32>
    %c0_26 = arith.constant 0 : index
    %c0_27 = arith.constant 0 : index
    %197 = vector.load %arg12[%c0_26, %c0_27] : memref<1x32xf32, #tpu.memory_space<vmem>>, vector<1x32xf32>
    %198 = vector.broadcast %197 : vector<1x32xf32> to vector<8x32xf32>
    %199 = arith.addf %196, %198 : vector<8x32xf32>
    %c0_28 = arith.constant 0 : index
    %c0_29 = arith.constant 0 : index
    %200 = vector.load %arg2[%c0_28, %c0_29] : memref<8x2xi32, #tpu.memory_space<vmem>>, vector<8x2xi32>
    %201 = vector.extract_strided_slice %200 {offsets = [0, 0], sizes = [8, 1], strides = [1, 1]} : vector<8x2xi32> to vector<8x1xi32>
    %202 = vector.broadcast %201 : vector<8x1xi32> to vector<8x56xi32>
    %203 = vector.broadcast %12 : vector<1x56xi32> to vector<8x56xi32>
    %204 = arith.cmpi eq, %202, %203 : vector<8x56xi32>
    %205 = arith.extui %204 : vector<8x56xi1> to vector<8x56xi32>
    %206 = arith.sitofp %205 : vector<8x56xi32> to vector<8x56xf32>
    %207 = vector.extract_strided_slice %200 {offsets = [0, 1], sizes = [8, 1], strides = [1, 1]} : vector<8x2xi32> to vector<8x1xi32>
    %208 = vector.broadcast %207 : vector<8x1xi32> to vector<8x56xi32>
    %209 = vector.broadcast %12 : vector<1x56xi32> to vector<8x56xi32>
    %210 = arith.cmpi eq, %208, %209 : vector<8x56xi32>
    %211 = arith.extui %210 : vector<8x56xi1> to vector<8x56xi32>
    %212 = arith.sitofp %211 : vector<8x56xi32> to vector<8x56xf32>
    %c0_30 = arith.constant 0 : index
    %c0_31 = arith.constant 0 : index
    %213 = vector.load %arg4[%c0_30, %c0_31] : memref<56x32xf32, #tpu.memory_space<vmem>>, vector<56x32xf32>
    %cst_32 = arith.constant dense<0.000000e+00> : vector<8x32xf32>
    %214 = tpu.matmul %206, %213, %cst_32 {dimension_numbers = #tpu.dot_dimension_numbers<[1], [0], [0], [1], [0, 0, 1, 1], [], []>} : vector<8x56xf32>, vector<56x32xf32>, vector<8x32xf32> -> vector<8x32xf32>
    %c0_33 = arith.constant 0 : index
    %c0_34 = arith.constant 0 : index
    %215 = vector.load %arg4[%c0_33, %c0_34] : memref<56x32xf32, #tpu.memory_space<vmem>>, vector<56x32xf32>
    %cst_35 = arith.constant dense<0.000000e+00> : vector<8x32xf32>
    %216 = tpu.matmul %212, %215, %cst_35 {dimension_numbers = #tpu.dot_dimension_numbers<[1], [0], [0], [1], [0, 0, 1, 1], [], []>} : vector<8x56xf32>, vector<56x32xf32>, vector<8x32xf32> -> vector<8x32xf32>
    %217 = arith.mulf %199, %214 : vector<8x32xf32>
    %cst_36 = arith.constant dense<0.000000e+00> : vector<8xf32>
    %218 = vector.multi_reduction <add>, %217, %cst_36 [1] : vector<8x32xf32> to vector<8xf32>
    %219 = vector.shape_cast %218 : vector<8xf32> to vector<8x1xf32>
    %c0_37 = arith.constant 0 : index
    %c0_38 = arith.constant 0 : index
    %220 = vector.load %arg13[%c0_37, %c0_38] : memref<8x2xf32, #tpu.memory_space<vmem>>, vector<8x1xf32>
    tpu.vector_store %arg13[%c0_37, %c0_38], %219 {strides = array<i32>} : memref<8x2xf32, #tpu.memory_space<vmem>>, vector<8x1xf32>,
    %221 = arith.mulf %199, %216 : vector<8x32xf32>
    %cst_39 = arith.constant dense<0.000000e+00> : vector<8xf32>
    %222 = vector.multi_reduction <add>, %221, %cst_39 [1] : vector<8x32xf32> to vector<8xf32>
    %223 = vector.shape_cast %222 : vector<8xf32> to vector<8x1xf32>
    %c0_40 = arith.constant 0 : index
    %c1 = arith.constant 1 : index
    %224 = vector.load %arg13[%c0_40, %c1] : memref<8x2xf32, #tpu.memory_space<vmem>>, vector<8x1xf32>
    tpu.vector_store %arg13[%c0_40, %c1], %223 {strides = array<i32>} : memref<8x2xf32, #tpu.memory_space<vmem>>, vector<8x1xf32>,
    return
  }
  func.func @transform_0(%arg0: i32) -> (i32, i32) {
    %c0_i32 = arith.constant 0 : i32
    %c0_i32_0 = arith.constant 0 : i32
    return %arg0, %c0_i32 : i32, i32
  }
  func.func @transform_1(%arg0: i32) -> (i32, i32) {
    %c0_i32 = arith.constant 0 : i32
    %c0_i32_0 = arith.constant 0 : i32
    return %arg0, %c0_i32 : i32, i32
  }
  func.func @transform_2(%arg0: i32) -> (i32, i32) {
    %c0_i32 = arith.constant 0 : i32
    %c0_i32_0 = arith.constant 0 : i32
    %c0_i32_1 = arith.constant 0 : i32
    return %c0_i32, %c0_i32_0 : i32, i32
  }
  func.func @transform_3(%arg0: i32) -> (i32, i32) {
    %c0_i32 = arith.constant 0 : i32
    %c0_i32_0 = arith.constant 0 : i32
    %c0_i32_1 = arith.constant 0 : i32
    return %c0_i32, %c0_i32_0 : i32, i32
  }
  func.func @transform_4(%arg0: i32) -> (i32, i32) {
    %c0_i32 = arith.constant 0 : i32
    %c0_i32_0 = arith.constant 0 : i32
    %c0_i32_1 = arith.constant 0 : i32
    return %c0_i32, %c0_i32_0 : i32, i32
  }
  func.func @transform_5(%arg0: i32) -> (i32, i32) {
    %c0_i32 = arith.constant 0 : i32
    %c0_i32_0 = arith.constant 0 : i32
    %c0_i32_1 = arith.constant 0 : i32
    return %c0_i32, %c0_i32_0 : i32, i32
  }
  func.func @transform_6(%arg0: i32) -> (i32, i32) {
    %c0_i32 = arith.constant 0 : i32
    %c0_i32_0 = arith.constant 0 : i32
    %c0_i32_1 = arith.constant 0 : i32
    return %c0_i32, %c0_i32_0 : i32, i32
  }
  func.func @transform_7(%arg0: i32) -> (i32, i32) {
    %c0_i32 = arith.constant 0 : i32
    %c0_i32_0 = arith.constant 0 : i32
    %c0_i32_1 = arith.constant 0 : i32
    return %c0_i32, %c0_i32_0 : i32, i32
  }
  func.func @transform_8(%arg0: i32) -> (i32, i32) {
    %c0_i32 = arith.constant 0 : i32
    %c0_i32_0 = arith.constant 0 : i32
    %c0_i32_1 = arith.constant 0 : i32
    return %c0_i32, %c0_i32_0 : i32, i32
  }
  func.func @transform_9(%arg0: i32) -> (i32, i32) {
    %c0_i32 = arith.constant 0 : i32
    %c0_i32_0 = arith.constant 0 : i32
    %c0_i32_1 = arith.constant 0 : i32
    return %c0_i32, %c0_i32_0 : i32, i32
  }
  func.func @transform_10(%arg0: i32) -> (i32, i32) {
    %c0_i32 = arith.constant 0 : i32
    %c0_i32_0 = arith.constant 0 : i32
    %c0_i32_1 = arith.constant 0 : i32
    return %c0_i32, %c0_i32_0 : i32, i32
  }
  func.func @transform_11(%arg0: i32) -> (i32, i32) {
    %c0_i32 = arith.constant 0 : i32
    %c0_i32_0 = arith.constant 0 : i32
    %c0_i32_1 = arith.constant 0 : i32
    return %c0_i32, %c0_i32_0 : i32, i32
  }
  func.func @transform_12(%arg0: i32) -> (i32, i32) {
    %c0_i32 = arith.constant 0 : i32
    %c0_i32_0 = arith.constant 0 : i32
    return %arg0, %c0_i32 : i32, i32
  }
  func.func @transform_13(%arg0: i32) -> (i32, i32) {
    %c0_i32 = arith.constant 0 : i32
    %c0_i32_0 = arith.constant 0 : i32
    return %arg0, %c0_i32 : i32, i32
  }
}

</mosaic_0001>

<llo_original>
// kernel: tpu_custom_call.1
$region0: #{tpu_custom_call.1}
  #allocation0 [shape = 'u32[]', space=smem, size = 0x4, offset = 0x4, fixed_abs, tag = 'smem constant byte address 0x4 - core index']
  #allocation1 [shape = 'u32[144,128]{1,0:T(1,128)}', space=vmem, size = 0x12000, scoped, tag = 'internal scratch']
  %s0 = inlined_call_operand.vmem [shape: s32[8,16], index: 0, kind: input, shape index: {}]
  %s1 = inlined_call_operand.vmem [shape: s32[8,2], index: 1, kind: input, shape index: {}]
  %s2 = inlined_call_operand.vmem [shape: f32[56,32], index: 2, kind: input, shape index: {}]
  %s3 = inlined_call_operand.vmem [shape: f32[56,32], index: 3, kind: input, shape index: {}]
  %s4 = inlined_call_operand.vmem [shape: f32[32,32], index: 4, kind: input, shape index: {}]
  %s5 = inlined_call_operand.vmem [shape: f32[1,32], index: 5, kind: input, shape index: {}]
  %s6 = inlined_call_operand.vmem [shape: f32[32,64], index: 6, kind: input, shape index: {}]
  %s7 = inlined_call_operand.vmem [shape: f32[1,64], index: 7, kind: input, shape index: {}]
  %s8 = inlined_call_operand.vmem [shape: f32[32,32], index: 8, kind: input, shape index: {}]
  %s9 = inlined_call_operand.vmem [shape: f32[1,32], index: 9, kind: input, shape index: {}]
  %s10 = inlined_call_operand.vmem [shape: f32[32,32], index: 10, kind: input, shape index: {}]
  %s11 = inlined_call_operand.vmem [shape: f32[1,32], index: 11, kind: input, shape index: {}]
  %s12 = inlined_call_operand.vmem [shape: f32[8,2], index: 12, kind: output, shape index: {0}]
  %s13 = inlined_call_operand.hbm [shape: f32[8,64], index: 13, kind: output, shape index: {1}]
  %14 = xla_tuple %s12, %s13
  %s15 = sld [smem:[#allocation0]]
  $region66: #{tpu_custom_call.1} parent=0
    _
  %s17 = ssub.s32 1, %s15
  %s18 = scalar_select 0, %s17, %s15
  $region1: #{tpu_custom_call.1} parent=0
    #allocation2 [shape = 'u8[4096]{0}', space=vmem, size = 0x1000, scoped, tag = 'output window, operand 1, single buffered']
    #allocation3 [shape = 's32[1]{0}', space=sflag, size = 0x4, scoped, tag = 'scoped memory for tpu_custom_call.1']
    %19 = vsyncpa [#allocation3], 0
    // Predicated region
    $region2: #{tpu_custom_call.1} parent=1 // pred_check
      _
    $region3: #{tpu_custom_call.1} parent=1 // pred_check_branch
      %21 = sbr.rel (0) target = $region5
    $region4: #{tpu_custom_call.1} parent=1 // pred_region
      _
    $region5: #{tpu_custom_call.1} parent=1 // pred_fallthru
      _
    // Predicated region
    $region6: #{tpu_custom_call.1} parent=1 // pred_check
      _
    $region7: #{tpu_custom_call.1} parent=1 // pred_check_branch
      %23 = sbr.rel (0) target = $region9
    $region8: #{tpu_custom_call.1} parent=1 // pred_region
      _
    $region9: #{tpu_custom_call.1} parent=1 // pred_fallthru
      _
    // Predicated region
    $region10: #{tpu_custom_call.1} parent=1 // pred_check
      _
    $region11: #{tpu_custom_call.1} parent=1 // pred_check_branch
      %25 = sbr.rel (0) target = $region13
    $region12: #{tpu_custom_call.1} parent=1 // pred_region
      _
    $region13: #{tpu_custom_call.1} parent=1 // pred_fallthru
      _
    // Predicated region
    $region14: #{tpu_custom_call.1} parent=1 // pred_check
      _
    $region15: #{tpu_custom_call.1} parent=1 // pred_check_branch
      %27 = sbr.rel (0) target = $region17
    $region16: #{tpu_custom_call.1} parent=1 // pred_region
      _
    $region17: #{tpu_custom_call.1} parent=1 // pred_fallthru
      _
    // Predicated region
    $region18: #{tpu_custom_call.1} parent=1 // pred_check
      _
    $region19: #{tpu_custom_call.1} parent=1 // pred_check_branch
      %29 = sbr.rel (0) target = $region21
    $region20: #{tpu_custom_call.1} parent=1 // pred_region
      _
    $region21: #{tpu_custom_call.1} parent=1 // pred_fallthru
      _
    // Predicated region
    $region22: #{tpu_custom_call.1} parent=1 // pred_check
      _
    $region23: #{tpu_custom_call.1} parent=1 // pred_check_branch
      %31 = sbr.rel (0) target = $region25
    $region24: #{tpu_custom_call.1} parent=1 // pred_region
      _
    $region25: #{tpu_custom_call.1} parent=1 // pred_fallthru
      _
    // Predicated region
    $region26: #{tpu_custom_call.1} parent=1 // pred_check
      _
    $region27: #{tpu_custom_call.1} parent=1 // pred_check_branch
      %33 = sbr.rel (0) target = $region29
    $region28: #{tpu_custom_call.1} parent=1 // pred_region
      _
    $region29: #{tpu_custom_call.1} parent=1 // pred_fallthru
      _
    // Predicated region
    $region30: #{tpu_custom_call.1} parent=1 // pred_check
      _
    $region31: #{tpu_custom_call.1} parent=1 // pred_check_branch
      %35 = sbr.rel (0) target = $region33
    $region32: #{tpu_custom_call.1} parent=1 // pred_region
      _
    $region33: #{tpu_custom_call.1} parent=1 // pred_fallthru
      _
    // Predicated region
    $region34: #{tpu_custom_call.1} parent=1 // pred_check
      _
    $region35: #{tpu_custom_call.1} parent=1 // pred_check_branch
      %37 = sbr.rel (0) target = $region37
    $region36: #{tpu_custom_call.1} parent=1 // pred_region
      _
    $region37: #{tpu_custom_call.1} parent=1 // pred_fallthru
      _
    // Predicated region
    $region38: #{tpu_custom_call.1} parent=1 // pred_check
      _
    $region39: #{tpu_custom_call.1} parent=1 // pred_check_branch
      %39 = sbr.rel (0) target = $region41
    $region40: #{tpu_custom_call.1} parent=1 // pred_region
      _
    $region41: #{tpu_custom_call.1} parent=1 // pred_fallthru
      _
    // Predicated region
    $region42: #{tpu_custom_call.1} parent=1 // pred_check
      _
    $region43: #{tpu_custom_call.1} parent=1 // pred_check_branch
      %41 = sbr.rel (0) target = $region45
    $region44: #{tpu_custom_call.1} parent=1 // pred_region
      _
    $region45: #{tpu_custom_call.1} parent=1 // pred_fallthru
      _
    // Predicated region
    $region46: #{tpu_custom_call.1} parent=1 // pred_check
      _
    $region47: #{tpu_custom_call.1} parent=1 // pred_check_branch
      %43 = sbr.rel (0) target = $region49
    $region48: #{tpu_custom_call.1} parent=1 // pred_region
      _
    $region49: #{tpu_custom_call.1} parent=1 // pred_fallthru
      _
    %v44 = vld [vmem:[%s0] sm:$0xff]
    %vm45 = vcmp.ne.s32.totalorder %v44, 0
    %v46 = vsel %vm45, 1, 0
    %v47 = vcvt.s32.f32 %v46
    %vm48 = vcmask 130048
    %v49 = vsel %vm48, %v47, 0.0
    %50 = vadd.xlane.f32.xlu0 %v49
    %v51 = vpop.xlane.xlu0 %50
    %v52 = vmax.f32 %v51, 1e-24
    %v53 = vrsqrt.pop %v52
    %v54 = vmul.f32 %v47, %v53
    %v55 = vlaneseq
    %v56 = vand.u32 %v55, 127
    %57 = vset.pattern.permute.xlu0 0
    %58 = vperm.xlu0 %57, %v44
    %v59 = vpop.permute.xlu0 %58
    %vm60 = vcmp.eq.s32.totalorder %v59, %v56
    %v61 = vsel %vm60, 1, 0
    %v62 = vcvt.s32.f32 %v61
    %64 = vset.pattern.permute.xlu0 0
    %65 = vperm.xlu0 %64, %v54
    %v66 = vpop.permute.xlu0 %65
    %v68 = vmul.f32 %v66, %v62
    %v69 = vadd.f32 %v68, 0.0
    %70 = vset.pattern.permute.xlu0 1
    %71 = vperm.xlu0 %70, %v44
    %v72 = vpop.permute.xlu0 %71
    %vm73 = vcmp.eq.s32.totalorder %v72, %v56
    %v74 = vsel %vm73, 1, 0
    %v75 = vcvt.s32.f32 %v74
    %76 = vset.pattern.permute.xlu0 1
    %77 = vperm.xlu0 %76, %v54
    %v78 = vpop.permute.xlu0 %77
    %v80 = vmul.f32 %v78, %v75
    %v81 = vadd.f32 %v69, %v80
    %82 = vset.pattern.permute.xlu0 2
    %83 = vperm.xlu0 %82, %v44
    %v84 = vpop.permute.xlu0 %83
    %vm85 = vcmp.eq.s32.totalorder %v84, %v56
    %v86 = vsel %vm85, 1, 0
    %v87 = vcvt.s32.f32 %v86
    %88 = vset.pattern.permute.xlu0 2
    %89 = vperm.xlu0 %88, %v54
    %v90 = vpop.permute.xlu0 %89
    %v92 = vmul.f32 %v90, %v87
    %v93 = vadd.f32 %v81, %v92
    %94 = vset.pattern.permute.xlu0 3
    %95 = vperm.xlu0 %94, %v44
    %v96 = vpop.permute.xlu0 %95
    %vm97 = vcmp.eq.s32.totalorder %v96, %v56
    %v98 = vsel %vm97, 1, 0
    %v99 = vcvt.s32.f32 %v98
    %100 = vset.pattern.permute.xlu0 3
    %101 = vperm.xlu0 %100, %v54
    %v102 = vpop.permute.xlu0 %101
    %v104 = vmul.f32 %v102, %v99
    %v105 = vadd.f32 %v93, %v104
    %106 = vset.pattern.permute.xlu0 4
    %107 = vperm.xlu0 %106, %v44
    %v108 = vpop.permute.xlu0 %107
    %vm109 = vcmp.eq.s32.totalorder %v108, %v56
    %v110 = vsel %vm109, 1, 0
    %v111 = vcvt.s32.f32 %v110
    %112 = vset.pattern.permute.xlu0 4
    %113 = vperm.xlu0 %112, %v54
    %v114 = vpop.permute.xlu0 %113
    %v116 = vmul.f32 %v114, %v111
    %v117 = vadd.f32 %v105, %v116
    %118 = vset.pattern.permute.xlu0 5
    %119 = vperm.xlu0 %118, %v44
    %v120 = vpop.permute.xlu0 %119
    %vm121 = vcmp.eq.s32.totalorder %v120, %v56
    %v122 = vsel %vm121, 1, 0
    %v123 = vcvt.s32.f32 %v122
    %124 = vset.pattern.permute.xlu0 5
    %125 = vperm.xlu0 %124, %v54
    %v126 = vpop.permute.xlu0 %125
    %v128 = vmul.f32 %v126, %v123
    %v129 = vadd.f32 %v117, %v128
    %130 = vset.pattern.permute.xlu0 6
    %131 = vperm.xlu0 %130, %v44
    %v132 = vpop.permute.xlu0 %131
    %vm133 = vcmp.eq.s32.totalorder %v132, %v56
    %v134 = vsel %vm133, 1, 0
    %v135 = vcvt.s32.f32 %v134
    %136 = vset.pattern.permute.xlu0 6
    %137 = vperm.xlu0 %136, %v54
    %v138 = vpop.permute.xlu0 %137
    %v140 = vmul.f32 %v138, %v135
    %v141 = vadd.f32 %v129, %v140
    %142 = vset.pattern.permute.xlu0 7
    %143 = vperm.xlu0 %142, %v44
    %v144 = vpop.permute.xlu0 %143
    %vm145 = vcmp.eq.s32.totalorder %v144, %v56
    %v146 = vsel %vm145, 1, 0
    %v147 = vcvt.s32.f32 %v146
    %148 = vset.pattern.permute.xlu0 7
    %149 = vperm.xlu0 %148, %v54
    %v150 = vpop.permute.xlu0 %149
    %v152 = vmul.f32 %v150, %v147
    %v153 = vadd.f32 %v141, %v152
    %154 = vset.pattern.permute.xlu0 8
    %155 = vperm.xlu0 %154, %v44
    %v156 = vpop.permute.xlu0 %155
    %vm157 = vcmp.eq.s32.totalorder %v156, %v56
    %v158 = vsel %vm157, 1, 0
    %v159 = vcvt.s32.f32 %v158
    %160 = vset.pattern.permute.xlu0 8
    %161 = vperm.xlu0 %160, %v54
    %v162 = vpop.permute.xlu0 %161
    %v164 = vmul.f32 %v162, %v159
    %v165 = vadd.f32 %v153, %v164
    %166 = vset.pattern.permute.xlu0 9
    %167 = vperm.xlu0 %166, %v44
    %v168 = vpop.permute.xlu0 %167
    %vm169 = vcmp.eq.s32.totalorder %v168, %v56
    %v170 = vsel %vm169, 1, 0
    %v171 = vcvt.s32.f32 %v170
    %172 = vset.pattern.permute.xlu0 9
    %173 = vperm.xlu0 %172, %v54
    %v174 = vpop.permute.xlu0 %173
    %v176 = vmul.f32 %v174, %v171
    %v177 = vadd.f32 %v165, %v176
    %178 = vset.pattern.permute.xlu0 10
    %179 = vperm.xlu0 %178, %v44
    %v180 = vpop.permute.xlu0 %179
    %vm181 = vcmp.eq.s32.totalorder %v180, %v56
    %v182 = vsel %vm181, 1, 0
    %v183 = vcvt.s32.f32 %v182
    %184 = vset.pattern.permute.xlu0 10
    %185 = vperm.xlu0 %184, %v54
    %v186 = vpop.permute.xlu0 %185
    %v188 = vmul.f32 %v186, %v183
    %v189 = vadd.f32 %v177, %v188
    %190 = vset.pattern.permute.xlu0 11
    %191 = vperm.xlu0 %190, %v44
    %v192 = vpop.permute.xlu0 %191
    %vm193 = vcmp.eq.s32.totalorder %v192, %v56
    %v194 = vsel %vm193, 1, 0
    %v195 = vcvt.s32.f32 %v194
    %196 = vset.pattern.permute.xlu0 11
    %197 = vperm.xlu0 %196, %v54
    %v198 = vpop.permute.xlu0 %197
    %v200 = vmul.f32 %v198, %v195
    %v201 = vadd.f32 %v189, %v200
    %202 = vset.pattern.permute.xlu0 12
    %203 = vperm.xlu0 %202, %v44
    %v204 = vpop.permute.xlu0 %203
    %vm205 = vcmp.eq.s32.totalorder %v204, %v56
    %v206 = vsel %vm205, 1, 0
    %v207 = vcvt.s32.f32 %v206
    %208 = vset.pattern.permute.xlu0 12
    %209 = vperm.xlu0 %208, %v54
    %v210 = vpop.permute.xlu0 %209
    %v212 = vmul.f32 %v210, %v207
    %v213 = vadd.f32 %v201, %v212
    %214 = vset.pattern.permute.xlu0 13
    %215 = vperm.xlu0 %214, %v44
    %v216 = vpop.permute.xlu0 %215
    %vm217 = vcmp.eq.s32.totalorder %v216, %v56
    %v218 = vsel %vm217, 1, 0
    %v219 = vcvt.s32.f32 %v218
    %220 = vset.pattern.permute.xlu0 13
    %221 = vperm.xlu0 %220, %v54
    %v222 = vpop.permute.xlu0 %221
    %v224 = vmul.f32 %v222, %v219
    %v225 = vadd.f32 %v213, %v224
    %226 = vset.pattern.permute.xlu0 14
    %227 = vperm.xlu0 %226, %v44
    %v228 = vpop.permute.xlu0 %227
    %vm229 = vcmp.eq.s32.totalorder %v228, %v56
    %v230 = vsel %vm229, 1, 0
    %v231 = vcvt.s32.f32 %v230
    %232 = vset.pattern.permute.xlu0 14
    %233 = vperm.xlu0 %232, %v54
    %v234 = vpop.permute.xlu0 %233
    %v236 = vmul.f32 %v234, %v231
    %v237 = vadd.f32 %v225, %v236
    %238 = vset.pattern.permute.xlu0 15
    %239 = vperm.xlu0 %238, %v44
    %v240 = vpop.permute.xlu0 %239
    %vm241 = vcmp.eq.s32.totalorder %v240, %v56
    %v242 = vsel %vm241, 1, 0
    %v243 = vcvt.s32.f32 %v242
    %244 = vset.pattern.permute.xlu0 15
    %245 = vperm.xlu0 %244, %v54
    %v246 = vpop.permute.xlu0 %245
    %v248 = vmul.f32 %v246, %v243
    %v249 = vadd.f32 %v237, %v248
    %v250 = vld [vmem:[%s2] sm:$0xff]
    %v251 = vld [vmem:[%s2 + $0x8] sm:$0xff]
    %v252 = vld [vmem:[%s2 + $0x10] sm:$0xff]
    %v253 = vld [vmem:[%s2 + $0x18] sm:$0xff]
    %v254 = vld [vmem:[%s2 + $0x20] sm:$0xff]
    %v255 = vld [vmem:[%s2 + $0x28] sm:$0xff]
    %v256 = vld [vmem:[%s2 + $0x30] sm:$0xff]
    %vm257 = vcmask 457728
    %v259 = vsel %vm257, %v249, 0
    %261 = vmatprep.subr.mxu0 0.0
    %262 = vmatpush1.msra.mxu0 0.0
    %263 = vmatprep.subr.mxu0 0.0
    %264 = vmatpush1.msra.mxu0 0.0
    %265 = vmatprep.subr.mxu0 0.0
    %266 = vmatpush1.msra.mxu0 0.0
    %267 = vmatprep.subr.mxu0 0.0
    %268 = vmatpush1.msra.mxu0 0.0
    %269 = vmatprep.subr.mxu0 0.0
    %270 = vmatpush1.msra.mxu0 0.0
    %271 = vmatprep.subr.mxu0 0.0
    %272 = vmatpush1.msra.mxu0 0.0
    %273 = vmatprep.subr.mxu0 0.0
    %274 = vmatpush1.msra.mxu0 0.0
    %275 = vmatprep.subr.mxu0 0.0
    %276 = vmatpush1.msra.mxu0 0.0
    %277 = vmatprep.subr.mxu0 0.0
    %278 = vmatpush1.msra.mxu0 0.0
    %279 = vmatprep.subr.mxu0 0.0
    %280 = vmatpush1.msra.mxu0 %v256
    %281 = vmatprep.subr.mxu0 0.0
    %282 = vmatpush1.msra.mxu0 %v255
    %283 = vmatprep.subr.mxu0 0.0
    %284 = vmatpush1.msra.mxu0 %v254
    %285 = vmatprep.subr.mxu0 0.0
    %286 = vmatpush1.msra.mxu0 %v253
    %287 = vmatprep.subr.mxu0 0.0
    %288 = vmatpush1.msra.mxu0 %v252
    %289 = vmatprep.subr.mxu0 0.0
    %290 = vmatpush1.msra.mxu0 %v251
    %291 = vmatprep.subr.mxu0 0.0
    %292 = vmatpush1.msra.mxu0 %v250
    %293 = vmatprep.subr.mxu0 0.0
    %294 = vmatpush2.msra.mxu0 0.0
    %295 = vmatprep.subr.mxu0 0.0
    %296 = vmatpush2.msra.mxu0 0.0
    %297 = vmatprep.subr.mxu0 0.0
    %298 = vmatpush2.msra.mxu0 0.0
    %299 = vmatprep.subr.mxu0 0.0
    %300 = vmatpush2.msra.mxu0 0.0
    %301 = vmatprep.subr.mxu0 0.0
    %302 = vmatpush2.msra.mxu0 0.0
    %303 = vmatprep.subr.mxu0 0.0
    %304 = vmatpush2.msra.mxu0 0.0
    %305 = vmatprep.subr.mxu0 0.0
    %306 = vmatpush2.msra.mxu0 0.0
    %307 = vmatprep.subr.mxu0 0.0
    %308 = vmatpush2.msra.mxu0 0.0
    %309 = vmatprep.subr.mxu0 0.0
    %310 = vmatpush2.msra.mxu0 0.0
    %311 = vmatprep.subr.mxu0 0.0
    %312 = vmatpush2.msra.mxu0 0.0
    %313 = vmatprep.subr.mxu0 0.0
    %314 = vmatpush2.msra.mxu0 0.0
    %315 = vmatprep.subr.mxu0 0.0
    %316 = vmatpush2.msra.mxu0 0.0
    %317 = vmatprep.subr.mxu0 0.0
    %318 = vmatpush2.msra.mxu0 0.0
    %319 = vmatprep.subr.mxu0 0.0
    %320 = vmatpush2.msra.mxu0 0.0
    %321 = vmatprep.subr.mxu0 0.0
    %322 = vmatpush2.msra.mxu0 0.0
    %323 = vmatprep.subr.mxu0 0.0
    %324 = vmatpush2.msra.mxu0 0.0
    %325 = vmatprep.mubr.f32.mxu0 0.0
    %326 = vmatmul.mubr.f32.gmra.mxu0 %v259
    %v327 = vpop.f32.mrf.mxu0
    %v328 = vadd.f32 0.0, %v327
    %v329 = vpop.f32.mrf.mxu0
    %330 = vdwg.mxu0
    %v331 = vld [vmem:[%s4] sm:$0xff]
    %v332 = vld [vmem:[%s4 + $0x8] sm:$0xff]
    %v333 = vld [vmem:[%s4 + $0x10] sm:$0xff]
    %v334 = vld [vmem:[%s4 + $0x18] sm:$0xff]
    %v335 = vld [vmem:[%s5] sm:$0x1]
    %v337 = vlaneseq
    %v338 = vshrl.u32 %v337, 7
    %v339 = vsub.s32 0, %v338
    %v340 = vrot.slane %v335, %v339
    %vm342 = vcmask 261120
    %v344 = vsel %vm342, %v328, 0
    %346 = vmatprep.subr.mxu0 0.0
    %347 = vmatpush1.msra.mxu0 0.0
    %348 = vmatprep.subr.mxu0 0.0
    %349 = vmatpush1.msra.mxu0 0.0
    %350 = vmatprep.subr.mxu0 0.0
    %351 = vmatpush1.msra.mxu0 0.0
    %352 = vmatprep.subr.mxu0 0.0
    %353 = vmatpush1.msra.mxu0 0.0
    %354 = vmatprep.subr.mxu0 0.0
    %355 = vmatpush1.msra.mxu0 0.0
    %356 = vmatprep.subr.mxu0 0.0
    %357 = vmatpush1.msra.mxu0 0.0
    %358 = vmatprep.subr.mxu0 0.0
    %359 = vmatpush1.msra.mxu0 0.0
    %360 = vmatprep.subr.mxu0 0.0
    %361 = vmatpush1.msra.mxu0 0.0
    %362 = vmatprep.subr.mxu0 0.0
    %363 = vmatpush1.msra.mxu0 0.0
    %364 = vmatprep.subr.mxu0 0.0
    %365 = vmatpush1.msra.mxu0 0.0
    %366 = vmatprep.subr.mxu0 0.0
    %367 = vmatpush1.msra.mxu0 0.0
    %368 = vmatprep.subr.mxu0 0.0
    %369 = vmatpush1.msra.mxu0 0.0
    %370 = vmatprep.subr.mxu0 0.0
    %371 = vmatpush1.msra.mxu0 %v334
    %372 = vmatprep.subr.mxu0 0.0
    %373 = vmatpush1.msra.mxu0 %v333
    %374 = vmatprep.subr.mxu0 0.0
    %375 = vmatpush1.msra.mxu0 %v332
    %376 = vmatprep.subr.mxu0 0.0
    %377 = vmatpush1.msra.mxu0 %v331
    %378 = vmatprep.subr.mxu0 0.0
    %379 = vmatpush2.msra.mxu0 0.0
    %380 = vmatprep.subr.mxu0 0.0
    %381 = vmatpush2.msra.mxu0 0.0
    %382 = vmatprep.subr.mxu0 0.0
    %383 = vmatpush2.msra.mxu0 0.0
    %384 = vmatprep.subr.mxu0 0.0
    %385 = vmatpush2.msra.mxu0 0.0
    %386 = vmatprep.subr.mxu0 0.0
    %387 = vmatpush2.msra.mxu0 0.0
    %388 = vmatprep.subr.mxu0 0.0
    %389 = vmatpush2.msra.mxu0 0.0
    %390 = vmatprep.subr.mxu0 0.0
    %391 = vmatpush2.msra.mxu0 0.0
    %392 = vmatprep.subr.mxu0 0.0
    %393 = vmatpush2.msra.mxu0 0.0
    %394 = vmatprep.subr.mxu0 0.0
    %395 = vmatpush2.msra.mxu0 0.0
    %396 = vmatprep.subr.mxu0 0.0
    %397 = vmatpush2.msra.mxu0 0.0
    %398 = vmatprep.subr.mxu0 0.0
    %399 = vmatpush2.msra.mxu0 0.0
    %400 = vmatprep.subr.mxu0 0.0
    %401 = vmatpush2.msra.mxu0 0.0
    %402 = vmatprep.subr.mxu0 0.0
    %403 = vmatpush2.msra.mxu0 0.0
    %404 = vmatprep.subr.mxu0 0.0
    %405 = vmatpush2.msra.mxu0 0.0
    %406 = vmatprep.subr.mxu0 0.0
    %407 = vmatpush2.msra.mxu0 0.0
    %408 = vmatprep.subr.mxu0 0.0
    %409 = vmatpush2.msra.mxu0 0.0
    %410 = vmatprep.mubr.f32.mxu0 0.0
    %411 = vmatmul.mubr.f32.gmra.mxu0 %v344
    %v412 = vpop.f32.mrf.mxu0
    %v413 = vadd.f32 %v340, %v412
    %v414 = vpop.f32.mrf.mxu0
    %415 = vdwg.mxu0
    %v416 = vtanh.pop %v413
    %v417 = vld [vmem:[%s6] sm:$0xff]
    %v418 = vld [vmem:[%s6 + $0x8] sm:$0xff]
    %v419 = vld [vmem:[%s6 + $0x10] sm:$0xff]
    %v420 = vld [vmem:[%s6 + $0x18] sm:$0xff]
    %v421 = vld [vmem:[%s7] sm:$0x1]
    %v423 = vlaneseq
    %v424 = vshrl.u32 %v423, 7
    %v425 = vsub.s32 0, %v424
    %v426 = vrot.slane %v421, %v425
    %v429 = vsel %vm342, %v416, 0
    %431 = vmatprep.subr.mxu0 0.0
    %432 = vmatpush1.msra.mxu0 0.0
    %433 = vmatprep.subr.mxu0 0.0
    %434 = vmatpush1.msra.mxu0 0.0
    %435 = vmatprep.subr.mxu0 0.0
    %436 = vmatpush1.msra.mxu0 0.0
    %437 = vmatprep.subr.mxu0 0.0
    %438 = vmatpush1.msra.mxu0 0.0
    %439 = vmatprep.subr.mxu0 0.0
    %440 = vmatpush1.msra.mxu0 0.0
    %441 = vmatprep.subr.mxu0 0.0
    %442 = vmatpush1.msra.mxu0 0.0
    %443 = vmatprep.subr.mxu0 0.0
    %444 = vmatpush1.msra.mxu0 0.0
    %445 = vmatprep.subr.mxu0 0.0
    %446 = vmatpush1.msra.mxu0 0.0
    %447 = vmatprep.subr.mxu0 0.0
    %448 = vmatpush1.msra.mxu0 0.0
    %449 = vmatprep.subr.mxu0 0.0
    %450 = vmatpush1.msra.mxu0 0.0
    %451 = vmatprep.subr.mxu0 0.0
    %452 = vmatpush1.msra.mxu0 0.0
    %453 = vmatprep.subr.mxu0 0.0
    %454 = vmatpush1.msra.mxu0 0.0
    %455 = vmatprep.subr.mxu0 0.0
    %456 = vmatpush1.msra.mxu0 %v420
    %457 = vmatprep.subr.mxu0 0.0
    %458 = vmatpush1.msra.mxu0 %v419
    %459 = vmatprep.subr.mxu0 0.0
    %460 = vmatpush1.msra.mxu0 %v418
    %461 = vmatprep.subr.mxu0 0.0
    %462 = vmatpush1.msra.mxu0 %v417
    %463 = vmatprep.subr.mxu0 0.0
    %464 = vmatpush2.msra.mxu0 0.0
    %465 = vmatprep.subr.mxu0 0.0
    %466 = vmatpush2.msra.mxu0 0.0
    %467 = vmatprep.subr.mxu0 0.0
    %468 = vmatpush2.msra.mxu0 0.0
    %469 = vmatprep.subr.mxu0 0.0
    %470 = vmatpush2.msra.mxu0 0.0
    %471 = vmatprep.subr.mxu0 0.0
    %472 = vmatpush2.msra.mxu0 0.0
    %473 = vmatprep.subr.mxu0 0.0
    %474 = vmatpush2.msra.mxu0 0.0
    %475 = vmatprep.subr.mxu0 0.0
    %476 = vmatpush2.msra.mxu0 0.0
    %477 = vmatprep.subr.mxu0 0.0
    %478 = vmatpush2.msra.mxu0 0.0
    %479 = vmatprep.subr.mxu0 0.0
    %480 = vmatpush2.msra.mxu0 0.0
    %481 = vmatprep.subr.mxu0 0.0
    %482 = vmatpush2.msra.mxu0 0.0
    %483 = vmatprep.subr.mxu0 0.0
    %484 = vmatpush2.msra.mxu0 0.0
    %485 = vmatprep.subr.mxu0 0.0
    %486 = vmatpush2.msra.mxu0 0.0
    %487 = vmatprep.subr.mxu0 0.0
    %488 = vmatpush2.msra.mxu0 0.0
    %489 = vmatprep.subr.mxu0 0.0
    %490 = vmatpush2.msra.mxu0 0.0
    %491 = vmatprep.subr.mxu0 0.0
    %492 = vmatpush2.msra.mxu0 0.0
    %493 = vmatprep.subr.mxu0 0.0
    %494 = vmatpush2.msra.mxu0 0.0
    %495 = vmatprep.mubr.f32.mxu0 0.0
    %496 = vmatmul.mubr.f32.gmra.mxu0 %v429
    %v497 = vpop.f32.mrf.mxu0
    %v498 = vadd.f32 %v426, %v497
    %v499 = vpop.f32.mrf.mxu0
    %500 = vdwg.mxu0
    %vm501 = vcmask 523264
    %502 = vst.msk [vmem:[#allocation2] sm:$0xff] %vm501, %v498
    %v503 = vld [vmem:[%s8] sm:$0xff]
    %v504 = vld [vmem:[%s8 + $0x8] sm:$0xff]
    %v505 = vld [vmem:[%s8 + $0x10] sm:$0xff]
    %v506 = vld [vmem:[%s8 + $0x18] sm:$0xff]
    %v507 = vld [vmem:[%s9] sm:$0x1]
    %v509 = vlaneseq
    %v510 = vshrl.u32 %v509, 7
    %v511 = vsub.s32 0, %v510
    %v512 = vrot.slane %v507, %v511
    %v515 = vsel %vm342, %v498, 0
    %517 = vmatprep.subr.mxu0 0.0
    %518 = vmatpush1.msra.mxu0 0.0
    %519 = vmatprep.subr.mxu0 0.0
    %520 = vmatpush1.msra.mxu0 0.0
    %521 = vmatprep.subr.mxu0 0.0
    %522 = vmatpush1.msra.mxu0 0.0
    %523 = vmatprep.subr.mxu0 0.0
    %524 = vmatpush1.msra.mxu0 0.0
    %525 = vmatprep.subr.mxu0 0.0
    %526 = vmatpush1.msra.mxu0 0.0
    %527 = vmatprep.subr.mxu0 0.0
    %528 = vmatpush1.msra.mxu0 0.0
    %529 = vmatprep.subr.mxu0 0.0
    %530 = vmatpush1.msra.mxu0 0.0
    %531 = vmatprep.subr.mxu0 0.0
    %532 = vmatpush1.msra.mxu0 0.0
    %533 = vmatprep.subr.mxu0 0.0
    %534 = vmatpush1.msra.mxu0 0.0
    %535 = vmatprep.subr.mxu0 0.0
    %536 = vmatpush1.msra.mxu0 0.0
    %537 = vmatprep.subr.mxu0 0.0
    %538 = vmatpush1.msra.mxu0 0.0
    %539 = vmatprep.subr.mxu0 0.0
    %540 = vmatpush1.msra.mxu0 0.0
    %541 = vmatprep.subr.mxu0 0.0
    %542 = vmatpush1.msra.mxu0 %v506
    %543 = vmatprep.subr.mxu0 0.0
    %544 = vmatpush1.msra.mxu0 %v505
    %545 = vmatprep.subr.mxu0 0.0
    %546 = vmatpush1.msra.mxu0 %v504
    %547 = vmatprep.subr.mxu0 0.0
    %548 = vmatpush1.msra.mxu0 %v503
    %549 = vmatprep.subr.mxu0 0.0
    %550 = vmatpush2.msra.mxu0 0.0
    %551 = vmatprep.subr.mxu0 0.0
    %552 = vmatpush2.msra.mxu0 0.0
    %553 = vmatprep.subr.mxu0 0.0
    %554 = vmatpush2.msra.mxu0 0.0
    %555 = vmatprep.subr.mxu0 0.0
    %556 = vmatpush2.msra.mxu0 0.0
    %557 = vmatprep.subr.mxu0 0.0
    %558 = vmatpush2.msra.mxu0 0.0
    %559 = vmatprep.subr.mxu0 0.0
    %560 = vmatpush2.msra.mxu0 0.0
    %561 = vmatprep.subr.mxu0 0.0
    %562 = vmatpush2.msra.mxu0 0.0
    %563 = vmatprep.subr.mxu0 0.0
    %564 = vmatpush2.msra.mxu0 0.0
    %565 = vmatprep.subr.mxu0 0.0
    %566 = vmatpush2.msra.mxu0 0.0
    %567 = vmatprep.subr.mxu0 0.0
    %568 = vmatpush2.msra.mxu0 0.0
    %569 = vmatprep.subr.mxu0 0.0
    %570 = vmatpush2.msra.mxu0 0.0
    %571 = vmatprep.subr.mxu0 0.0
    %572 = vmatpush2.msra.mxu0 0.0
    %573 = vmatprep.subr.mxu0 0.0
    %574 = vmatpush2.msra.mxu0 0.0
    %575 = vmatprep.subr.mxu0 0.0
    %576 = vmatpush2.msra.mxu0 0.0
    %577 = vmatprep.subr.mxu0 0.0
    %578 = vmatpush2.msra.mxu0 0.0
    %579 = vmatprep.subr.mxu0 0.0
    %580 = vmatpush2.msra.mxu0 0.0
    %581 = vmatprep.mubr.f32.mxu0 0.0
    %582 = vmatmul.mubr.f32.gmra.mxu0 %v515
    %v583 = vpop.f32.mrf.mxu0
    %v584 = vadd.f32 %v512, %v583
    %v585 = vpop.f32.mrf.mxu0
    %586 = vdwg.mxu0
    %v587 = vtanh.pop %v584
    %v588 = vld [vmem:[%s10] sm:$0xff]
    %v589 = vld [vmem:[%s10 + $0x8] sm:$0xff]
    %v590 = vld [vmem:[%s10 + $0x10] sm:$0xff]
    %v591 = vld [vmem:[%s10 + $0x18] sm:$0xff]
    %v592 = vld [vmem:[%s11] sm:$0x1]
    %v594 = vlaneseq
    %v595 = vshrl.u32 %v594, 7
    %v596 = vsub.s32 0, %v595
    %v597 = vrot.slane %v592, %v596
    %v600 = vsel %vm342, %v587, 0
    %602 = vmatprep.subr.mxu0 0.0
    %603 = vmatpush1.msra.mxu0 0.0
    %604 = vmatprep.subr.mxu0 0.0
    %605 = vmatpush1.msra.mxu0 0.0
    %606 = vmatprep.subr.mxu0 0.0
    %607 = vmatpush1.msra.mxu0 0.0
    %608 = vmatprep.subr.mxu0 0.0
    %609 = vmatpush1.msra.mxu0 0.0
    %610 = vmatprep.subr.mxu0 0.0
    %611 = vmatpush1.msra.mxu0 0.0
    %612 = vmatprep.subr.mxu0 0.0
    %613 = vmatpush1.msra.mxu0 0.0
    %614 = vmatprep.subr.mxu0 0.0
    %615 = vmatpush1.msra.mxu0 0.0
    %616 = vmatprep.subr.mxu0 0.0
    %617 = vmatpush1.msra.mxu0 0.0
    %618 = vmatprep.subr.mxu0 0.0
    %619 = vmatpush1.msra.mxu0 0.0
    %620 = vmatprep.subr.mxu0 0.0
    %621 = vmatpush1.msra.mxu0 0.0
    %622 = vmatprep.subr.mxu0 0.0
    %623 = vmatpush1.msra.mxu0 0.0
    %624 = vmatprep.subr.mxu0 0.0
    %625 = vmatpush1.msra.mxu0 0.0
    %626 = vmatprep.subr.mxu0 0.0
    %627 = vmatpush1.msra.mxu0 %v591
    %628 = vmatprep.subr.mxu0 0.0
    %629 = vmatpush1.msra.mxu0 %v590
    %630 = vmatprep.subr.mxu0 0.0
    %631 = vmatpush1.msra.mxu0 %v589
    %632 = vmatprep.subr.mxu0 0.0
    %633 = vmatpush1.msra.mxu0 %v588
    %634 = vmatprep.subr.mxu0 0.0
    %635 = vmatpush2.msra.mxu0 0.0
    %636 = vmatprep.subr.mxu0 0.0
    %637 = vmatpush2.msra.mxu0 0.0
    %638 = vmatprep.subr.mxu0 0.0
    %639 = vmatpush2.msra.mxu0 0.0
    %640 = vmatprep.subr.mxu0 0.0
    %641 = vmatpush2.msra.mxu0 0.0
    %642 = vmatprep.subr.mxu0 0.0
    %643 = vmatpush2.msra.mxu0 0.0
    %644 = vmatprep.subr.mxu0 0.0
    %645 = vmatpush2.msra.mxu0 0.0
    %646 = vmatprep.subr.mxu0 0.0
    %647 = vmatpush2.msra.mxu0 0.0
    %648 = vmatprep.subr.mxu0 0.0
    %649 = vmatpush2.msra.mxu0 0.0
    %650 = vmatprep.subr.mxu0 0.0
    %651 = vmatpush2.msra.mxu0 0.0
    %652 = vmatprep.subr.mxu0 0.0
    %653 = vmatpush2.msra.mxu0 0.0
    %654 = vmatprep.subr.mxu0 0.0
    %655 = vmatpush2.msra.mxu0 0.0
    %656 = vmatprep.subr.mxu0 0.0
    %657 = vmatpush2.msra.mxu0 0.0
    %658 = vmatprep.subr.mxu0 0.0
    %659 = vmatpush2.msra.mxu0 0.0
    %660 = vmatprep.subr.mxu0 0.0
    %661 = vmatpush2.msra.mxu0 0.0
    %662 = vmatprep.subr.mxu0 0.0
    %663 = vmatpush2.msra.mxu0 0.0
    %664 = vmatprep.subr.mxu0 0.0
    %665 = vmatpush2.msra.mxu0 0.0
    %666 = vmatprep.mubr.f32.mxu0 0.0
    %667 = vmatmul.mubr.f32.gmra.mxu0 %v600
    %v668 = vpop.f32.mrf.mxu0
    %v669 = vadd.f32 %v597, %v668
    %v670 = vpop.f32.mrf.mxu0
    %671 = vdwg.mxu0
    %v672 = vld [vmem:[%s1] sm:$0xff]
    %673 = vset.pattern.permute.xlu0 0
    %674 = vperm.xlu0 %673, %v672
    %v675 = vpop.permute.xlu0 %674
    %vm676 = vcmp.eq.s32.totalorder %v675, %v56
    %v677 = vsel %vm676, 1, 0
    %v678 = vcvt.s32.f32 %v677
    %679 = vset.pattern.permute.xlu0 1
    %680 = vperm.xlu0 %679, %v672
    %v681 = vpop.permute.xlu0 %680
    %vm682 = vcmp.eq.s32.totalorder %v681, %v56
    %v683 = vsel %vm682, 1, 0
    %v684 = vcvt.s32.f32 %v683
    %v685 = vld [vmem:[%s3] sm:$0xff]
    %v686 = vld [vmem:[%s3 + $0x8] sm:$0xff]
    %v687 = vld [vmem:[%s3 + $0x10] sm:$0xff]
    %v688 = vld [vmem:[%s3 + $0x18] sm:$0xff]
    %v689 = vld [vmem:[%s3 + $0x20] sm:$0xff]
    %v690 = vld [vmem:[%s3 + $0x28] sm:$0xff]
    %v691 = vld [vmem:[%s3 + $0x30] sm:$0xff]
    %v693 = vsel %vm257, %v678, 0
    %695 = vmatprep.subr.mxu0 0.0
    %696 = vmatpush1.msra.mxu0 0.0
    %697 = vmatprep.subr.mxu0 0.0
    %698 = vmatpush1.msra.mxu0 0.0
    %699 = vmatprep.subr.mxu0 0.0
    %700 = vmatpush1.msra.mxu0 0.0
    %701 = vmatprep.subr.mxu0 0.0
    %702 = vmatpush1.msra.mxu0 0.0
    %703 = vmatprep.subr.mxu0 0.0
    %704 = vmatpush1.msra.mxu0 0.0
    %705 = vmatprep.subr.mxu0 0.0
    %706 = vmatpush1.msra.mxu0 0.0
    %707 = vmatprep.subr.mxu0 0.0
    %708 = vmatpush1.msra.mxu0 0.0
    %709 = vmatprep.subr.mxu0 0.0
    %710 = vmatpush1.msra.mxu0 0.0
    %711 = vmatprep.subr.mxu0 0.0
    %712 = vmatpush1.msra.mxu0 0.0
    %713 = vmatprep.subr.mxu0 0.0
    %714 = vmatpush1.msra.mxu0 %v691
    %715 = vmatprep.subr.mxu0 0.0
    %716 = vmatpush1.msra.mxu0 %v690
    %717 = vmatprep.subr.mxu0 0.0
    %718 = vmatpush1.msra.mxu0 %v689
    %719 = vmatprep.subr.mxu0 0.0
    %720 = vmatpush1.msra.mxu0 %v688
    %721 = vmatprep.subr.mxu0 0.0
    %722 = vmatpush1.msra.mxu0 %v687
    %723 = vmatprep.subr.mxu0 0.0
    %724 = vmatpush1.msra.mxu0 %v686
    %725 = vmatprep.subr.mxu0 0.0
    %726 = vmatpush1.msra.mxu0 %v685
    %727 = vmatprep.subr.mxu0 0.0
    %728 = vmatpush2.msra.mxu0 0.0
    %729 = vmatprep.subr.mxu0 0.0
    %730 = vmatpush2.msra.mxu0 0.0
    %731 = vmatprep.subr.mxu0 0.0
    %732 = vmatpush2.msra.mxu0 0.0
    %733 = vmatprep.subr.mxu0 0.0
    %734 = vmatpush2.msra.mxu0 0.0
    %735 = vmatprep.subr.mxu0 0.0
    %736 = vmatpush2.msra.mxu0 0.0
    %737 = vmatprep.subr.mxu0 0.0
    %738 = vmatpush2.msra.mxu0 0.0
    %739 = vmatprep.subr.mxu0 0.0
    %740 = vmatpush2.msra.mxu0 0.0
    %741 = vmatprep.subr.mxu0 0.0
    %742 = vmatpush2.msra.mxu0 0.0
    %743 = vmatprep.subr.mxu0 0.0
    %744 = vmatpush2.msra.mxu0 0.0
    %745 = vmatprep.subr.mxu0 0.0
    %746 = vmatpush2.msra.mxu0 0.0
    %747 = vmatprep.subr.mxu0 0.0
    %748 = vmatpush2.msra.mxu0 0.0
    %749 = vmatprep.subr.mxu0 0.0
    %750 = vmatpush2.msra.mxu0 0.0
    %751 = vmatprep.subr.mxu0 0.0
    %752 = vmatpush2.msra.mxu0 0.0
    %753 = vmatprep.subr.mxu0 0.0
    %754 = vmatpush2.msra.mxu0 0.0
    %755 = vmatprep.subr.mxu0 0.0
    %756 = vmatpush2.msra.mxu0 0.0
    %757 = vmatprep.subr.mxu0 0.0
    %758 = vmatpush2.msra.mxu0 0.0
    %759 = vmatprep.mubr.f32.mxu0 0.0
    %760 = vmatmul.mubr.f32.gmra.mxu0 %v693
    %v761 = vpop.f32.mrf.mxu0
    %v762 = vadd.f32 0.0, %v761
    %v763 = vpop.f32.mrf.mxu0
    %764 = vdwg.mxu0
    %v766 = vsel %vm257, %v684, 0
    %768 = vmatprep.subr.mxu0 0.0
    %769 = vmatpush1.msra.mxu0 0.0
    %770 = vmatprep.subr.mxu0 0.0
    %771 = vmatpush1.msra.mxu0 0.0
    %772 = vmatprep.subr.mxu0 0.0
    %773 = vmatpush1.msra.mxu0 0.0
    %774 = vmatprep.subr.mxu0 0.0
    %775 = vmatpush1.msra.mxu0 0.0
    %776 = vmatprep.subr.mxu0 0.0
    %777 = vmatpush1.msra.mxu0 0.0
    %778 = vmatprep.subr.mxu0 0.0
    %779 = vmatpush1.msra.mxu0 0.0
    %780 = vmatprep.subr.mxu0 0.0
    %781 = vmatpush1.msra.mxu0 0.0
    %782 = vmatprep.subr.mxu0 0.0
    %783 = vmatpush1.msra.mxu0 0.0
    %784 = vmatprep.subr.mxu0 0.0
    %785 = vmatpush1.msra.mxu0 0.0
    %786 = vmatprep.subr.mxu0 0.0
    %787 = vmatpush1.msra.mxu0 %v691
    %788 = vmatprep.subr.mxu0 0.0
    %789 = vmatpush1.msra.mxu0 %v690
    %790 = vmatprep.subr.mxu0 0.0
    %791 = vmatpush1.msra.mxu0 %v689
    %792 = vmatprep.subr.mxu0 0.0
    %793 = vmatpush1.msra.mxu0 %v688
    %794 = vmatprep.subr.mxu0 0.0
    %795 = vmatpush1.msra.mxu0 %v687
    %796 = vmatprep.subr.mxu0 0.0
    %797 = vmatpush1.msra.mxu0 %v686
    %798 = vmatprep.subr.mxu0 0.0
    %799 = vmatpush1.msra.mxu0 %v685
    %800 = vmatprep.subr.mxu0 0.0
    %801 = vmatpush2.msra.mxu0 0.0
    %802 = vmatprep.subr.mxu0 0.0
    %803 = vmatpush2.msra.mxu0 0.0
    %804 = vmatprep.subr.mxu0 0.0
    %805 = vmatpush2.msra.mxu0 0.0
    %806 = vmatprep.subr.mxu0 0.0
    %807 = vmatpush2.msra.mxu0 0.0
    %808 = vmatprep.subr.mxu0 0.0
    %809 = vmatpush2.msra.mxu0 0.0
    %810 = vmatprep.subr.mxu0 0.0
    %811 = vmatpush2.msra.mxu0 0.0
    %812 = vmatprep.subr.mxu0 0.0
    %813 = vmatpush2.msra.mxu0 0.0
    %814 = vmatprep.subr.mxu0 0.0
    %815 = vmatpush2.msra.mxu0 0.0
    %816 = vmatprep.subr.mxu0 0.0
    %817 = vmatpush2.msra.mxu0 0.0
    %818 = vmatprep.subr.mxu0 0.0
    %819 = vmatpush2.msra.mxu0 0.0
    %820 = vmatprep.subr.mxu0 0.0
    %821 = vmatpush2.msra.mxu0 0.0
    %822 = vmatprep.subr.mxu0 0.0
    %823 = vmatpush2.msra.mxu0 0.0
    %824 = vmatprep.subr.mxu0 0.0
    %825 = vmatpush2.msra.mxu0 0.0
    %826 = vmatprep.subr.mxu0 0.0
    %827 = vmatpush2.msra.mxu0 0.0
    %828 = vmatprep.subr.mxu0 0.0
    %829 = vmatpush2.msra.mxu0 0.0
    %830 = vmatprep.subr.mxu0 0.0
    %831 = vmatpush2.msra.mxu0 0.0
    %832 = vmatprep.mubr.f32.mxu0 0.0
    %833 = vmatmul.mubr.f32.gmra.mxu0 %v766
    %v834 = vpop.f32.mrf.mxu0
    %v835 = vadd.f32 0.0, %v834
    %v836 = vpop.f32.mrf.mxu0
    %837 = vdwg.mxu0
    %v838 = vmul.f32 %v669, %v762
    %v839 = vsel %vm342, %v838, 0.0
    %840 = vadd.xlane.f32.xlu0 %v839
    %v841 = vpop.xlane.xlu0 %840
    %vm842 = vcmask 7168
    %843 = vst.msk [vmem:[%s12] sm:$0xff] %vm842, %v841
    %v844 = vmul.f32 %v669, %v835
    %v845 = vsel %vm342, %v844, 0.0
    %846 = vadd.xlane.f32.xlu0 %v845
    %v847 = vpop.xlane.xlu0 %846
    %vm848 = vcmask 15368
    %849 = vst.msk [vmem:[%s12] sm:$0xff] %vm848, %v847
    // Predicated region
    $region50: #{tpu_custom_call.1} parent=1 // pred_check
      _
    $region51: #{tpu_custom_call.1} parent=1 // pred_check_branch
      %851 = sbr.rel (0) target = $region53
    $region52: #{tpu_custom_call.1} parent=1 // pred_region
      _
    $region53: #{tpu_custom_call.1} parent=1 // pred_fallthru
      _
    // Predicated region
    $region54: #{tpu_custom_call.1} parent=1 // pred_check
      _
    $region55: #{tpu_custom_call.1} parent=1 // pred_check_branch
      %853 = sbr.rel (0) target = $region57
    $region56: #{tpu_custom_call.1} parent=1 // pred_region
      %s855 = ssub.s32 128, 128
      %856 = vsyncadd [#allocation3], %s855
      %s858 = sshll.u32 [#allocation2], 4
      %s859 = int_to_ptr.vmem [resolvable:$true] %s858
      %861 = dma.vmem_to_hbm [thread:$0]  %s859, 128, %s13, [#allocation3]
    $region57: #{tpu_custom_call.1} parent=1 // pred_fallthru
      _
    // Predicated region
    $region58: #{tpu_custom_call.1} parent=1 // pred_check
      _
    $region59: #{tpu_custom_call.1} parent=1 // pred_check_branch
      %863 = sbr.rel (0) target = $region61
    $region60: #{tpu_custom_call.1} parent=1 // pred_region
      _
    $region61: #{tpu_custom_call.1} parent=1 // pred_fallthru
      _
    // Predicated region
    $region62: #{tpu_custom_call.1} parent=1 // pred_check
      _
    $region63: #{tpu_custom_call.1} parent=1 // pred_check_branch
      %865 = sbr.rel (0) target = $region65
    $region64: #{tpu_custom_call.1} parent=1 // pred_region
      %866 = dma.done [#allocation3], 128
    $region65: #{tpu_custom_call.1} parent=1 // pred_fallthru
      _
    %867 = vsyncpa [#allocation3], 1

</llo_original>
